<compile_context>
chip_gen: v7x
topology: tpu7x:2x2x1
jax: 0.10.0
libtpu: 0.0.40
codegen_flags: <defaults>
</compile_context>

<pallas_src>
import functools

import jax
import jax.numpy as jnp
from jax.experimental import pallas as pl
from jax.experimental.pallas import tpu as pltpu

P_DROP = 0.2
_KEEP_SCALE = 1.0 / (1.0 - P_DROP)        # folded into w1/w2 at prep time
_DROP_THRESH = int(P_DROP * (2 ** 32))    # Python int -> jaxpr literal

_LANE = 128   # pad hidden/output feature dims to this for lane-dense matmul/store
_SUB = 8      # sublane width: batch tile granularity


def _round_up(n, m):
    return (n + m - 1) // m * m


def mlp_kernel(x_ref, bits1_ref, bits2_ref, w1_ref, w2_ref, w3_ref, o_ref):
    x = x_ref[...]                                    # (TILE_B, D) f32

    # dropout on input (keep-scale pre-folded into w1) -> fc1 -> relu
    h = jnp.where(bits1_ref[...] >= _DROP_THRESH, x, 0.0)
    h = jnp.maximum(
        jnp.dot(h.astype(jnp.bfloat16), w1_ref[...],
                preferred_element_type=jnp.float32), 0.0)

    # dropout on hidden (keep-scale pre-folded into w2) -> fc2 -> relu
    h = jnp.where(bits2_ref[...] >= _DROP_THRESH, h, 0.0)
    h = jnp.maximum(
        jnp.dot(h.astype(jnp.bfloat16), w2_ref[...],
                preferred_element_type=jnp.float32), 0.0)

    # fc3
    o_ref[...] = jnp.dot(
        h.astype(jnp.bfloat16), w3_ref[...],
        preferred_element_type=jnp.float32).astype(o_ref.dtype)


def prepare_params(w1, w2, w3):
    """One-time weight prep (outside the forward loop):
    fold the training-mode dropout 1/(1-p) scale into w1 and w2, zero-pad the
    hidden/output dims to multiples of 128 (lane-dense; padding is exact since
    padded rows/cols only ever touch zeros and the final slice discards them),
    and cast to bf16 for the native MXU path (f32 accumulation in-kernel)."""
    w1 = w1 * _KEEP_SCALE
    w2 = w2 * _KEEP_SCALE

    d, h = w1.shape
    _, o = w3.shape
    h_pad = _round_up(h, _LANE)
    o_pad = _round_up(o, _LANE)

    w1p = jnp.pad(w1, ((0, 0), (0, h_pad - h)))                  # (d, h_pad) - input dim unpadded
    w2p = jnp.pad(w2, ((0, h_pad - h), (0, h_pad - h)))          # (h_pad, h_pad)
    w3p = jnp.pad(w3, ((0, h_pad - h), (0, o_pad - o)))          # (h_pad, o_pad)
    return (w1p.astype(jnp.bfloat16),
            w2p.astype(jnp.bfloat16),
            w3p.astype(jnp.bfloat16))


@functools.partial(jax.jit, static_argnames=("out_size",))
def mlp_forward(x, w1p, w2p, w3p, key, *, out_size):
    """x: (B, input_size) f32; w*p: padded bf16 weights from prepare_params;
    key: jax PRNG key for the dropout masks. Returns (B, out_size) f32."""
    b, d = x.shape
    h_pad = w1p.shape[1]
    o_pad = w3p.shape[1]

    # Batch tiling: aim for >=2 grid steps (ceil(b/2) rows per tile) so the
    # "parallel" axis shards across v7x's two TensorCores, cap at 512 rows
    # (a (512, d) f32 tile is tiny in VMEM), keep a multiple of 8 sublanes.
    half = -(-b // 2)
    tile_b = min(512, _round_up(max(half, _SUB), _SUB))
    b_pad = _round_up(b, tile_b)
    grid = (b_pad // tile_b,)

    # Pad batch rows only; feature dim of x stays unpadded (no 4x HBM blow-up).
    x_pad = jnp.pad(x, ((0, b_pad - b), (0, 0)))

    # Dropout random bits, drawn outside the kernel (portable & reproducible,
    # independent of tile-size choices). Thresholding happens in-kernel.
    k1, k2 = jax.random.split(key)
    bits1 = jax.random.bits(k1, (b, d), jnp.uint32)
    bits2 = jax.random.bits(k2, (b, h_pad), jnp.uint32)
    bits1 = jnp.pad(bits1, ((0, b_pad - b), (0, 0)))
    bits2 = jnp.pad(bits2, ((0, b_pad - b), (0, 0)))

    flops = 2 * b_pad * (d * h_pad + h_pad * h_pad + h_pad * o_pad)
    bytes_accessed = (
        b_pad * d * 4            # x
        + b_pad * d * 4          # bits1
        + b_pad * h_pad * 4      # bits2
        + (d * h_pad + h_pad * h_pad + h_pad * o_pad) * 2   # bf16 weights
        + b_pad * o_pad * 4)     # out

    out_padded = pl.pallas_call(
        mlp_kernel,
        out_shape=jax.ShapeDtypeStruct((b_pad, o_pad), jnp.float32),
        grid=grid,
        in_specs=[
            pl.BlockSpec((tile_b, d), lambda i: (i, 0)),       # x tile (full feat dim)
            pl.BlockSpec((tile_b, d), lambda i: (i, 0)),       # dropout bits 1
            pl.BlockSpec((tile_b, h_pad), lambda i: (i, 0)),   # dropout bits 2
            pl.BlockSpec((d, h_pad), lambda i: (0, 0)),        # w1 VMEM-resident
            pl.BlockSpec((h_pad, h_pad), lambda i: (0, 0)),    # w2 VMEM-resident
            pl.BlockSpec((h_pad, o_pad), lambda i: (0, 0)),    # w3 VMEM-resident
        ],
        out_specs=pl.BlockSpec((tile_b, o_pad), lambda i: (i, 0)),
        compiler_params=pltpu.CompilerParams(
            dimension_semantics=("parallel",)),
        cost_estimate=pl.CostEstimate(
            flops=flops, transcendentals=0, bytes_accessed=bytes_accessed),
    )(x_pad, bits1, bits2, w1p, w2p, w3p)

    return out_padded[:b, :out_size]


def init_linear_weight(key, in_features, out_features):
    """PyTorch nn.Linear default init: U(-1/sqrt(in), 1/sqrt(in)),
    returned transposed as (in_features, out_features) for `x @ W` layout."""
    bound = 1.0 / jnp.sqrt(jnp.float32(in_features))
    w = jax.random.uniform(
        key, (out_features, in_features), jnp.float32, minval=-bound, maxval=bound
    )
    return w.T  # (in, out)


if __name__ == "__main__":
    # Small shapes consistent with the module: (batch, input_size) input.
    batch, input_size, hidden_size, output_size = 8, 32, 32, 16

    root = jax.random.PRNGKey(0)
    kx, k1, k2, k3, kdrop = jax.random.split(root, 5)

    x = jax.random.normal(kx, (batch, input_size), jnp.float32)
    w1 = init_linear_weight(k1, input_size, hidden_size)   # (32, 32)
    w2 = init_linear_weight(k2, hidden_size, hidden_size)  # (32, 32)
    w3 = init_linear_weight(k3, hidden_size, output_size)  # (32, 16)

    # One-time prep: fold dropout scale into w1/w2, pad hidden/out dims, bf16.
    w1p, w2p, w3p = prepare_params(w1, w2, w3)

    out = mlp_forward(x, w1p, w2p, w3p, kdrop, out_size=output_size)
    out = jax.block_until_ready(out)

    assert out.shape == (batch, output_size)
    assert out.dtype == jnp.float32
    assert bool(jnp.all(jnp.isfinite(out)))

    print("KERNEL_OK")
</pallas_src>

<mosaic_0001>
module attributes {stable_mosaic.version = 11 : i64} {
  func.func @mlp_kernel(%arg0: i32, %arg1: memref<8x32xf32, #tpu.memory_space<vmem>>, %arg2: memref<8x32xi32, #tpu.memory_space<vmem>>, %arg3: memref<8x128xi32, #tpu.memory_space<vmem>>, %arg4: memref<32x128xbf16, #tpu.memory_space<vmem>>, %arg5: memref<128x128xbf16, #tpu.memory_space<vmem>>, %arg6: memref<128x128xbf16, #tpu.memory_space<vmem>>, %arg7: memref<8x128xf32, #tpu.memory_space<vmem>>) attributes {dimension_semantics = [#tpu.dimension_semantics<parallel>], iteration_bounds = array<i64: 1>, scalar_prefetch = 0 : i64, scratch_operands = 0 : i64, tpu.core_type = #tpu.core_type<tc>, window_params = [{transform_indices = @transform_0, window_bounds = array<i64: 8, 32>}, {transform_indices = @transform_1, window_bounds = array<i64: 8, 32>}, {transform_indices = @transform_2, window_bounds = array<i64: 8, 128>}, {pipeline_mode = #tpu.pipeline_mode<synchronous>, transform_indices = @transform_3, window_bounds = array<i64: 32, 128>}, {pipeline_mode = #tpu.pipeline_mode<synchronous>, transform_indices = @transform_4, window_bounds = array<i64: 128, 128>}, {pipeline_mode = #tpu.pipeline_mode<synchronous>, transform_indices = @transform_5, window_bounds = array<i64: 128, 128>}, {transform_indices = @transform_6, window_bounds = array<i64: 8, 128>}]} {
    %c0 = arith.constant 0 : index
    %c0_0 = arith.constant 0 : index
    %0 = vector.load %arg1[%c0, %c0_0] : memref<8x32xf32, #tpu.memory_space<vmem>>, vector<8x32xf32>
    %c0_1 = arith.constant 0 : index
    %c0_2 = arith.constant 0 : index
    %1 = vector.load %arg2[%c0_1, %c0_2] : memref<8x32xi32, #tpu.memory_space<vmem>>, vector<8x32xi32>
    %c858993459_i32 = arith.constant 858993459 : i32
    %2 = vector.broadcast %c858993459_i32 : i32 to vector<8x32xi32>
    %3 = arith.cmpi uge, %1, %2 : vector<8x32xi32>
    %cst = arith.constant 0.000000e+00 : f32
    %4 = vector.broadcast %cst : f32 to vector<8x32xf32>
    %5 = arith.select %3, %0, %4 : vector<8x32xi1>, vector<8x32xf32>
    %6 = arith.truncf %5 : vector<8x32xf32> to vector<8x32xbf16>
    %c0_3 = arith.constant 0 : index
    %c0_4 = arith.constant 0 : index
    %7 = vector.load %arg4[%c0_3, %c0_4] : memref<32x128xbf16, #tpu.memory_space<vmem>>, vector<32x128xbf16>
    %cst_5 = arith.constant dense<0.000000e+00> : vector<8x128xf32>
    %8 = tpu.matmul %6, %7, %cst_5 {dimension_numbers = #tpu.dot_dimension_numbers<[1], [0], [0], [1], [0, 0, 1, 1], [], []>} : vector<8x32xbf16>, vector<32x128xbf16>, vector<8x128xf32> -> vector<8x128xf32>
    %cst_6 = arith.constant 0.000000e+00 : f32
    %9 = vector.broadcast %cst_6 : f32 to vector<8x128xf32>
    %10 = arith.maximumf %8, %9 : vector<8x128xf32>
    %c0_7 = arith.constant 0 : index
    %c0_8 = arith.constant 0 : index
    %11 = vector.load %arg3[%c0_7, %c0_8] : memref<8x128xi32, #tpu.memory_space<vmem>>, vector<8x128xi32>
    %c858993459_i32_9 = arith.constant 858993459 : i32
    %12 = vector.broadcast %c858993459_i32_9 : i32 to vector<8x128xi32>
    %13 = arith.cmpi uge, %11, %12 : vector<8x128xi32>
    %cst_10 = arith.constant 0.000000e+00 : f32
    %14 = vector.broadcast %cst_10 : f32 to vector<8x128xf32>
    %15 = arith.select %13, %10, %14 : vector<8x128xi1>, vector<8x128xf32>
    %16 = arith.truncf %15 : vector<8x128xf32> to vector<8x128xbf16>
    %c0_11 = arith.constant 0 : index
    %c0_12 = arith.constant 0 : index
    %17 = vector.load %arg5[%c0_11, %c0_12] : memref<128x128xbf16, #tpu.memory_space<vmem>>, vector<128x128xbf16>
    %cst_13 = arith.constant dense<0.000000e+00> : vector<8x128xf32>
    %18 = tpu.matmul %16, %17, %cst_13 {dimension_numbers = #tpu.dot_dimension_numbers<[1], [0], [0], [1], [0, 0, 1, 1], [], []>} : vector<8x128xbf16>, vector<128x128xbf16>, vector<8x128xf32> -> vector<8x128xf32>
    %cst_14 = arith.constant 0.000000e+00 : f32
    %19 = vector.broadcast %cst_14 : f32 to vector<8x128xf32>
    %20 = arith.maximumf %18, %19 : vector<8x128xf32>
    %21 = arith.truncf %20 : vector<8x128xf32> to vector<8x128xbf16>
    %c0_15 = arith.constant 0 : index
    %c0_16 = arith.constant 0 : index
    %22 = vector.load %arg6[%c0_15, %c0_16] : memref<128x128xbf16, #tpu.memory_space<vmem>>, vector<128x128xbf16>
    %cst_17 = arith.constant dense<0.000000e+00> : vector<8x128xf32>
    %23 = tpu.matmul %21, %22, %cst_17 {dimension_numbers = #tpu.dot_dimension_numbers<[1], [0], [0], [1], [0, 0, 1, 1], [], []>} : vector<8x128xbf16>, vector<128x128xbf16>, vector<8x128xf32> -> vector<8x128xf32>
    %c0_18 = arith.constant 0 : index
    %c0_19 = arith.constant 0 : index
    %24 = vector.load %arg7[%c0_18, %c0_19] : memref<8x128xf32, #tpu.memory_space<vmem>>, vector<8x128xf32>
    tpu.vector_store %arg7[%c0_18, %c0_19], %23 {strides = array<i32>} : memref<8x128xf32, #tpu.memory_space<vmem>>, vector<8x128xf32>,
    return
  }
  func.func @transform_0(%arg0: i32) -> (i32, i32) {
    %c0_i32 = arith.constant 0 : i32
    %c0_i32_0 = arith.constant 0 : i32
    return %arg0, %c0_i32 : i32, i32
  }
  func.func @transform_1(%arg0: i32) -> (i32, i32) {
    %c0_i32 = arith.constant 0 : i32
    %c0_i32_0 = arith.constant 0 : i32
    return %arg0, %c0_i32 : i32, i32
  }
  func.func @transform_2(%arg0: i32) -> (i32, i32) {
    %c0_i32 = arith.constant 0 : i32
    %c0_i32_0 = arith.constant 0 : i32
    return %arg0, %c0_i32 : i32, i32
  }
  func.func @transform_3(%arg0: i32) -> (i32, i32) {
    %c0_i32 = arith.constant 0 : i32
    %c0_i32_0 = arith.constant 0 : i32
    %c0_i32_1 = arith.constant 0 : i32
    return %c0_i32, %c0_i32_0 : i32, i32
  }
  func.func @transform_4(%arg0: i32) -> (i32, i32) {
    %c0_i32 = arith.constant 0 : i32
    %c0_i32_0 = arith.constant 0 : i32
    %c0_i32_1 = arith.constant 0 : i32
    return %c0_i32, %c0_i32_0 : i32, i32
  }
  func.func @transform_5(%arg0: i32) -> (i32, i32) {
    %c0_i32 = arith.constant 0 : i32
    %c0_i32_0 = arith.constant 0 : i32
    %c0_i32_1 = arith.constant 0 : i32
    return %c0_i32, %c0_i32_0 : i32, i32
  }
  func.func @transform_6(%arg0: i32) -> (i32, i32) {
    %c0_i32 = arith.constant 0 : i32
    %c0_i32_0 = arith.constant 0 : i32
    return %arg0, %c0_i32 : i32, i32
  }
}

</mosaic_0001>

<llo_original>
// kernel: mlp_forward.3
$region0: #{mlp_forward.3}
  #allocation0 [shape = 'u32[]', space=smem, size = 0x4, offset = 0x4, fixed_abs, tag = 'smem constant byte address 0x4 - core index']
  #allocation1 [shape = 'u32[144,128]{1,0:T(1,128)}', space=vmem, size = 0x12000, scoped, tag = 'internal scratch']
  %s0 = inlined_call_operand.vmem [shape: f32[8,32], index: 0, kind: input, shape index: {}]
  %s1 = inlined_call_operand.vmem [shape: u32[8,32], index: 1, kind: input, shape index: {}]
  %s2 = inlined_call_operand.vmem [shape: u32[8,128], index: 2, kind: input, shape index: {}]
  %s3 = inlined_call_operand.vmem [shape: bf16[32,128], index: 3, kind: input, shape index: {}]
  %s4 = inlined_call_operand.vmem [shape: bf16[128,128], index: 4, kind: input, shape index: {}]
  %s5 = inlined_call_operand.vmem [shape: bf16[128,128], index: 5, kind: input, shape index: {}]
  %s6 = inlined_call_operand.hbm [shape: f32[8,128], index: 6, kind: output, shape index: {}]
  %s7 = sld [smem:[#allocation0]]
  $region34: #{mlp_forward.3} parent=0
    _
  %s9 = ssub.s32 1, %s7
  %s10 = scalar_select 0, %s9, %s7
  $region1: #{mlp_forward.3} parent=0
    #allocation2 [shape = 'u8[4096]{0}', space=vmem, size = 0x1000, scoped, tag = 'output window, operand 0, single buffered']
    #allocation3 [shape = 's32[1]{0}', space=sflag, size = 0x4, scoped, tag = 'scoped memory for mlp_forward.3']
    %11 = vsyncpa [#allocation3], 0
    // Predicated region
    $region2: #{mlp_forward.3} parent=1 // pred_check
      _
    $region3: #{mlp_forward.3} parent=1 // pred_check_branch
      %13 = sbr.rel (0) target = $region5
    $region4: #{mlp_forward.3} parent=1 // pred_region
      _
    $region5: #{mlp_forward.3} parent=1 // pred_fallthru
      _
    // Predicated region
    $region6: #{mlp_forward.3} parent=1 // pred_check
      _
    $region7: #{mlp_forward.3} parent=1 // pred_check_branch
      %15 = sbr.rel (0) target = $region9
    $region8: #{mlp_forward.3} parent=1 // pred_region
      _
    $region9: #{mlp_forward.3} parent=1 // pred_fallthru
      _
    // Predicated region
    $region10: #{mlp_forward.3} parent=1 // pred_check
      _
    $region11: #{mlp_forward.3} parent=1 // pred_check_branch
      %17 = sbr.rel (0) target = $region13
    $region12: #{mlp_forward.3} parent=1 // pred_region
      _
    $region13: #{mlp_forward.3} parent=1 // pred_fallthru
      _
    // Predicated region
    $region14: #{mlp_forward.3} parent=1 // pred_check
      _
    $region15: #{mlp_forward.3} parent=1 // pred_check_branch
      %19 = sbr.rel (0) target = $region17
    $region16: #{mlp_forward.3} parent=1 // pred_region
      _
    $region17: #{mlp_forward.3} parent=1 // pred_fallthru
      _
    // Predicated region
    $region18: #{mlp_forward.3} parent=1 // pred_check
      _
    $region19: #{mlp_forward.3} parent=1 // pred_check_branch
      %21 = sbr.rel (0) target = $region21
    $region20: #{mlp_forward.3} parent=1 // pred_region
      _
    $region21: #{mlp_forward.3} parent=1 // pred_fallthru
      _
    // Predicated region
    $region22: #{mlp_forward.3} parent=1 // pred_check
      _
    $region23: #{mlp_forward.3} parent=1 // pred_check_branch
      %23 = sbr.rel (0) target = $region25
    $region24: #{mlp_forward.3} parent=1 // pred_region
      _
    $region25: #{mlp_forward.3} parent=1 // pred_fallthru
      _
    %v25 = vld [vmem:[%s0] sm:$0xff]
    %v26 = vld [vmem:[%s1] sm:$0xff]
    %vm27 = vcmp.ge.u32.totalorder %v26, 858993459
    %v28 = vsel %vm27, %v25, 0.0
    %v29 = vpack.c.bf16 %v28, %v28
    %v30 = vld [vmem:[%s3] sm:$0xf]
    %v31 = vld [vmem:[%s3 + $0x4] sm:$0xf]
    %v32 = vld [vmem:[%s3 + $0x8] sm:$0xf]
    %v33 = vld [vmem:[%s3 + $0xc] sm:$0xf]
    %v38 = vunpack.c.l.b16 %v30
    %v39 = vunpack.c.l.b16 %v31
    %v40 = vunpack.c.l.b16 %v32
    %v41 = vunpack.c.l.b16 %v33
    %v42 = vpack.c.b16 %v39, %v38
    %v43 = vpack.c.b16 %v41, %v40
    %vm46 = vcmask 261120
    %v48 = vsel %vm46, %v29, 0
    %50 = vmatprep.subr.bf16.mxu0 0
    %51 = vmatpush1.bf16.msra.mxu0 %v42
    %52 = vmatprep.subr.bf16.mxu0 0
    %53 = vmatpush1.bf16.msra.mxu0 %v43
    %54 = vmatprep.subr.bf16.mxu0 0
    %55 = vmatpush1.bf16.msra.mxu0 0
    %56 = vmatprep.subr.bf16.mxu0 0
    %57 = vmatpush1.bf16.msra.mxu0 0
    %58 = vmatprep.subr.bf16.mxu0 0
    %59 = vmatpush1.bf16.msra.mxu0 0
    %60 = vmatprep.subr.bf16.mxu0 0
    %61 = vmatpush1.bf16.msra.mxu0 0
    %62 = vmatprep.subr.bf16.mxu0 0
    %63 = vmatpush1.bf16.msra.mxu0 0
    %64 = vmatprep.subr.bf16.mxu0 0
    %65 = vmatpush1.bf16.msra.mxu0 0
    %66 = vmatprep.subr.bf16.mxu0 0
    %67 = vmatpush1.bf16.msra.mxu0 0
    %68 = vmatprep.subr.bf16.mxu0 0
    %69 = vmatpush1.bf16.msra.mxu0 0
    %70 = vmatprep.subr.bf16.mxu0 0
    %71 = vmatpush1.bf16.msra.mxu0 0
    %72 = vmatprep.subr.bf16.mxu0 0
    %73 = vmatpush1.bf16.msra.mxu0 0
    %74 = vmatprep.subr.bf16.mxu0 0
    %75 = vmatpush1.bf16.msra.mxu0 0
    %76 = vmatprep.subr.bf16.mxu0 0
    %77 = vmatpush1.bf16.msra.mxu0 0
    %78 = vmatprep.subr.bf16.mxu0 0
    %79 = vmatpush1.bf16.msra.mxu0 0
    %80 = vmatprep.subr.bf16.mxu0 0
    %81 = vmatpush1.bf16.msra.mxu0 0
    %82 = vmatprep.mubr.bf16.mxu0 0
    %83 = vmatmul.mubr.bf16.gmra.mrb[0].mxu0 %v48
    %v84 = vpop.f32.mrb[0].mxu0
    %v85 = vadd.f32 0.0, %v84
    %v86 = vpop.f32.mrb[0].mxu0
    %v87 = vpop.f32.mrb[0].mxu0
    %v88 = vpop.f32.mrb[0].mxu0
    %89 = vdwg.mxu0
    %v90 = vmax.f32 %v85, 0.0
    %v91 = vld [vmem:[%s2] sm:$0xff]
    %vm92 = vcmp.ge.u32.totalorder %v91, 858993459
    %v93 = vsel %vm92, %v90, 0.0
    %v94 = vpack.c.bf16 %v93, %v93
    %v95 = vld [vmem:[%s4] sm:$0xf]
    %v96 = vld [vmem:[%s4 + $0x4] sm:$0xf]
    %v97 = vld [vmem:[%s4 + $0x8] sm:$0xf]
    %v98 = vld [vmem:[%s4 + $0xc] sm:$0xf]
    %v99 = vld [vmem:[%s4 + $0x10] sm:$0xf]
    %v100 = vld [vmem:[%s4 + $0x14] sm:$0xf]
    %v101 = vld [vmem:[%s4 + $0x18] sm:$0xf]
    %v102 = vld [vmem:[%s4 + $0x1c] sm:$0xf]
    %v103 = vld [vmem:[%s4 + $0x20] sm:$0xf]
    %v104 = vld [vmem:[%s4 + $0x24] sm:$0xf]
    %v105 = vld [vmem:[%s4 + $0x28] sm:$0xf]
    %v106 = vld [vmem:[%s4 + $0x2c] sm:$0xf]
    %v107 = vld [vmem:[%s4 + $0x30] sm:$0xf]
    %v108 = vld [vmem:[%s4 + $0x34] sm:$0xf]
    %v109 = vld [vmem:[%s4 + $0x38] sm:$0xf]
    %v110 = vld [vmem:[%s4 + $0x3c] sm:$0xf]
    %v127 = vunpack.c.l.b16 %v95
    %v128 = vunpack.c.l.b16 %v96
    %v129 = vunpack.c.l.b16 %v97
    %v130 = vunpack.c.l.b16 %v98
    %v131 = vunpack.c.l.b16 %v99
    %v132 = vunpack.c.l.b16 %v100
    %v133 = vunpack.c.l.b16 %v101
    %v134 = vunpack.c.l.b16 %v102
    %v135 = vunpack.c.l.b16 %v103
    %v136 = vunpack.c.l.b16 %v104
    %v137 = vunpack.c.l.b16 %v105
    %v138 = vunpack.c.l.b16 %v106
    %v139 = vunpack.c.l.b16 %v107
    %v140 = vunpack.c.l.b16 %v108
    %v141 = vunpack.c.l.b16 %v109
    %v142 = vunpack.c.l.b16 %v110
    %v143 = vpack.c.b16 %v128, %v127
    %v144 = vpack.c.b16 %v130, %v129
    %v145 = vpack.c.b16 %v132, %v131
    %v146 = vpack.c.b16 %v134, %v133
    %v147 = vpack.c.b16 %v136, %v135
    %v148 = vpack.c.b16 %v138, %v137
    %v149 = vpack.c.b16 %v140, %v139
    %v150 = vpack.c.b16 %v142, %v141
    %159 = vmatprep.subr.bf16.mxu0 0
    %160 = vmatpush1.bf16.msra.mxu0 %v143
    %161 = vmatprep.subr.bf16.mxu0 0
    %162 = vmatpush1.bf16.msra.mxu0 %v144
    %163 = vmatprep.subr.bf16.mxu0 0
    %164 = vmatpush1.bf16.msra.mxu0 %v145
    %165 = vmatprep.subr.bf16.mxu0 0
    %166 = vmatpush1.bf16.msra.mxu0 %v146
    %167 = vmatprep.subr.bf16.mxu0 0
    %168 = vmatpush1.bf16.msra.mxu0 %v147
    %169 = vmatprep.subr.bf16.mxu0 0
    %170 = vmatpush1.bf16.msra.mxu0 %v148
    %171 = vmatprep.subr.bf16.mxu0 0
    %172 = vmatpush1.bf16.msra.mxu0 %v149
    %173 = vmatprep.subr.bf16.mxu0 0
    %174 = vmatpush1.bf16.msra.mxu0 %v150
    %175 = vmatprep.subr.bf16.mxu0 0
    %176 = vmatpush1.bf16.msra.mxu0 0
    %177 = vmatprep.subr.bf16.mxu0 0
    %178 = vmatpush1.bf16.msra.mxu0 0
    %179 = vmatprep.subr.bf16.mxu0 0
    %180 = vmatpush1.bf16.msra.mxu0 0
    %181 = vmatprep.subr.bf16.mxu0 0
    %182 = vmatpush1.bf16.msra.mxu0 0
    %183 = vmatprep.subr.bf16.mxu0 0
    %184 = vmatpush1.bf16.msra.mxu0 0
    %185 = vmatprep.subr.bf16.mxu0 0
    %186 = vmatpush1.bf16.msra.mxu0 0
    %187 = vmatprep.subr.bf16.mxu0 0
    %188 = vmatpush1.bf16.msra.mxu0 0
    %189 = vmatprep.subr.bf16.mxu0 0
    %190 = vmatpush1.bf16.msra.mxu0 0
    %191 = vmatprep.mubr.bf16.mxu0 0
    %192 = vmatmul.mubr.bf16.gmra.mrb[0].mxu0 %v94
    %v193 = vpop.f32.mrb[0].mxu0
    %v194 = vadd.f32 0.0, %v193
    %v195 = vpop.f32.mrb[0].mxu0
    %v196 = vpop.f32.mrb[0].mxu0
    %v197 = vpop.f32.mrb[0].mxu0
    %198 = vdwg.mxu0
    %v199 = vmax.f32 %v194, 0.0
    %v200 = vpack.c.bf16 %v199, %v199
    %v201 = vld [vmem:[%s5] sm:$0xf]
    %v202 = vld [vmem:[%s5 + $0x4] sm:$0xf]
    %v203 = vld [vmem:[%s5 + $0x8] sm:$0xf]
    %v204 = vld [vmem:[%s5 + $0xc] sm:$0xf]
    %v205 = vld [vmem:[%s5 + $0x10] sm:$0xf]
    %v206 = vld [vmem:[%s5 + $0x14] sm:$0xf]
    %v207 = vld [vmem:[%s5 + $0x18] sm:$0xf]
    %v208 = vld [vmem:[%s5 + $0x1c] sm:$0xf]
    %v209 = vld [vmem:[%s5 + $0x20] sm:$0xf]
    %v210 = vld [vmem:[%s5 + $0x24] sm:$0xf]
    %v211 = vld [vmem:[%s5 + $0x28] sm:$0xf]
    %v212 = vld [vmem:[%s5 + $0x2c] sm:$0xf]
    %v213 = vld [vmem:[%s5 + $0x30] sm:$0xf]
    %v214 = vld [vmem:[%s5 + $0x34] sm:$0xf]
    %v215 = vld [vmem:[%s5 + $0x38] sm:$0xf]
    %v216 = vld [vmem:[%s5 + $0x3c] sm:$0xf]
    %v233 = vunpack.c.l.b16 %v201
    %v234 = vunpack.c.l.b16 %v202
    %v235 = vunpack.c.l.b16 %v203
    %v236 = vunpack.c.l.b16 %v204
    %v237 = vunpack.c.l.b16 %v205
    %v238 = vunpack.c.l.b16 %v206
    %v239 = vunpack.c.l.b16 %v207
    %v240 = vunpack.c.l.b16 %v208
    %v241 = vunpack.c.l.b16 %v209
    %v242 = vunpack.c.l.b16 %v210
    %v243 = vunpack.c.l.b16 %v211
    %v244 = vunpack.c.l.b16 %v212
    %v245 = vunpack.c.l.b16 %v213
    %v246 = vunpack.c.l.b16 %v214
    %v247 = vunpack.c.l.b16 %v215
    %v248 = vunpack.c.l.b16 %v216
    %v249 = vpack.c.b16 %v234, %v233
    %v250 = vpack.c.b16 %v236, %v235
    %v251 = vpack.c.b16 %v238, %v237
    %v252 = vpack.c.b16 %v240, %v239
    %v253 = vpack.c.b16 %v242, %v241
    %v254 = vpack.c.b16 %v244, %v243
    %v255 = vpack.c.b16 %v246, %v245
    %v256 = vpack.c.b16 %v248, %v247
    %265 = vmatprep.subr.bf16.mxu0 0
    %266 = vmatpush1.bf16.msra.mxu0 %v249
    %267 = vmatprep.subr.bf16.mxu0 0
    %268 = vmatpush1.bf16.msra.mxu0 %v250
    %269 = vmatprep.subr.bf16.mxu0 0
    %270 = vmatpush1.bf16.msra.mxu0 %v251
    %271 = vmatprep.subr.bf16.mxu0 0
    %272 = vmatpush1.bf16.msra.mxu0 %v252
    %273 = vmatprep.subr.bf16.mxu0 0
    %274 = vmatpush1.bf16.msra.mxu0 %v253
    %275 = vmatprep.subr.bf16.mxu0 0
    %276 = vmatpush1.bf16.msra.mxu0 %v254
    %277 = vmatprep.subr.bf16.mxu0 0
    %278 = vmatpush1.bf16.msra.mxu0 %v255
    %279 = vmatprep.subr.bf16.mxu0 0
    %280 = vmatpush1.bf16.msra.mxu0 %v256
    %281 = vmatprep.subr.bf16.mxu0 0
    %282 = vmatpush1.bf16.msra.mxu0 0
    %283 = vmatprep.subr.bf16.mxu0 0
    %284 = vmatpush1.bf16.msra.mxu0 0
    %285 = vmatprep.subr.bf16.mxu0 0
    %286 = vmatpush1.bf16.msra.mxu0 0
    %287 = vmatprep.subr.bf16.mxu0 0
    %288 = vmatpush1.bf16.msra.mxu0 0
    %289 = vmatprep.subr.bf16.mxu0 0
    %290 = vmatpush1.bf16.msra.mxu0 0
    %291 = vmatprep.subr.bf16.mxu0 0
    %292 = vmatpush1.bf16.msra.mxu0 0
    %293 = vmatprep.subr.bf16.mxu0 0
    %294 = vmatpush1.bf16.msra.mxu0 0
    %295 = vmatprep.subr.bf16.mxu0 0
    %296 = vmatpush1.bf16.msra.mxu0 0
    %297 = vmatprep.mubr.bf16.mxu0 0
    %298 = vmatmul.mubr.bf16.gmra.mrb[0].mxu0 %v200
    %v299 = vpop.f32.mrb[0].mxu0
    %v300 = vadd.f32 0.0, %v299
    %v301 = vpop.f32.mrb[0].mxu0
    %v302 = vpop.f32.mrb[0].mxu0
    %v303 = vpop.f32.mrb[0].mxu0
    %304 = vdwg.mxu0
    %305 = vst [vmem:[#allocation2] sm:$0xff] %v300
    // Predicated region
    $region26: #{mlp_forward.3} parent=1 // pred_check
      _
    $region27: #{mlp_forward.3} parent=1 // pred_check_branch
      %307 = sbr.rel (0) target = $region29
    $region28: #{mlp_forward.3} parent=1 // pred_region
      %s309 = ssub.s32 128, 128
      %310 = vsyncadd [#allocation3], %s309
      %s312 = sshll.u32 [#allocation2], 4
      %s313 = int_to_ptr.vmem [resolvable:$true] %s312
      %315 = dma.vmem_to_hbm [thread:$0]  %s313, 128, %s6, [#allocation3]
    $region29: #{mlp_forward.3} parent=1 // pred_fallthru
      _
    // Predicated region
    $region30: #{mlp_forward.3} parent=1 // pred_check
      _
    $region31: #{mlp_forward.3} parent=1 // pred_check_branch
      %317 = sbr.rel (0) target = $region33
    $region32: #{mlp_forward.3} parent=1 // pred_region
      %318 = dma.done [#allocation3], 128
    $region33: #{mlp_forward.3} parent=1 // pred_fallthru
      _
    %319 = vsyncpa [#allocation3], 1

</llo_original>
